<compile_context>
chip_gen: v7x
topology: tpu7x:2x2x1
jax: 0.10.0
libtpu: 0.0.40
codegen_flags: <defaults>
</compile_context>

<pallas_src>
import functools

import jax
import jax.numpy as jnp
from jax.experimental import pallas as pl
from jax.experimental.pallas import tpu as pltpu


def _round_up(x, m):
    return ((x + m - 1) // m) * m


def gru_transition_kernel(data_ref, state_ref, w_dg_ref, b_ref, w_sg_ref,
                          w_h2h_ref, out_ref, *, state_dim, padded_dim):
    """One batch tile of the GRU transition.

    Column layout (Sp = padded_dim, multiple of 128; padded columns are zero):
      data projection  fused[:, :]   : [0:S) input_to_state,
                                       [Sp:Sp+S) update-gate (data part),
                                       [2*Sp:2*Sp+S) reset-gate (data part)
      state projection sgate[:, :]   : [0:S) update-gate (state part),
                                       [Sp:Sp+S) reset-gate (state part)
    All slice starts are 128-lane aligned -> zero-cost views.
    """
    S, Sp = state_dim, padded_dim

    state_f32 = state_ref[...]                        # [TB, S] f32 (gate math)
    data_bf = data_ref[...].astype(jnp.bfloat16)      # MXU-native operands
    state_bf = state_f32.astype(jnp.bfloat16)

    # Two MXU pushes (no zero block, no concat); f32 accumulation.
    fused = (jnp.dot(data_bf, w_dg_ref[...],
                     preferred_element_type=jnp.float32) + b_ref[...])
    sgate = jnp.dot(state_bf, w_sg_ref[...],
                    preferred_element_type=jnp.float32)

    input_state = fused[:, 0:S]
    update_gate = jax.nn.sigmoid(fused[:, Sp:Sp + S] + sgate[:, 0:S])
    reset_gate = jax.nn.sigmoid(fused[:, 2 * Sp:2 * Sp + S]
                                + sgate[:, Sp:Sp + S])

    # h2h(state * reset) must stay a separate matmul (depends on reset gate).
    state_hat = jnp.tanh(
        input_state
        + jnp.dot((state_f32 * reset_gate).astype(jnp.bfloat16),
                  w_h2h_ref[...], preferred_element_type=jnp.float32))

    # new_state = z*h_hat + (1-z)*h == h + z*(h_hat - h)
    out_ref[...] = state_f32 + update_gate * (state_hat - state_f32)


def _pick_batch_tile(B, max_tb=1024):
    """Largest batch tile that divides B, is a multiple of 128 (else 8),
    fits max_tb, and leaves >= 2 grid steps when B >= 16 (v7x megacore)."""
    cap = min(max_tb, B)
    if B >= 16:
        cap = min(cap, B // 2)
    if cap >= B:
        return B
    for quantum in (128, 8):
        tb = (cap // quantum) * quantum
        while tb >= quantum:
            if B % tb == 0:
                return tb
            tb -= quantum
    return B  # fallback: single full-batch block


def _vmem_limit_bytes():
    try:
        cap = int(pltpu.get_tpu_info().vmem_capacity_bytes)
    except Exception:
        cap = 128 * 1024 * 1024
    # Raise the scoped limit (defaults 16/32 MiB) but stay well under physical
    # capacity (v7x only has 64 MiB per TensorCore).
    return int(min(64 * 1024 * 1024, (cap * 3) // 4))


def my_gru_transition(data, state, params):
    """Pallas-backed forward of MyGRUTransition.

    data:  [B, input_dim]  float32
    state: [B, state_dim]  float32
    params: dict from init_params (contains pre-fused / padded bf16 weights).
    """
    B, I = data.shape
    S = state.shape[1]

    w_dg = params["w_dg_bf16"]      # [I, 3*Sp] bf16
    b_fused = params["b_fused"]     # [1, 3*Sp] f32
    w_sg = params["w_sg_bf16"]      # [S, 2*Sp] bf16
    w_h2h = params["w_h2h_bf16"]    # [S, S]    bf16
    Sp = w_dg.shape[1] // 3

    TB = _pick_batch_tile(B)
    grid = (B // TB,)

    kernel = functools.partial(gru_transition_kernel,
                               state_dim=S, padded_dim=Sp)

    def build(single_buffer_weights):
        wkw = ({"pipeline_mode": pl.Buffered(buffer_count=1)}
               if single_buffer_weights else {})
        return pl.pallas_call(
            kernel,
            out_shape=jax.ShapeDtypeStruct((B, S), jnp.float32),
            grid_spec=pltpu.PrefetchScalarGridSpec(
                num_scalar_prefetch=0,
                grid=grid,
                in_specs=[
                    # batch-tiled activations
                    pl.BlockSpec((TB, I), lambda i: (i, 0)),
                    pl.BlockSpec((TB, S), lambda i: (i, 0)),
                    # weights pinned in VMEM across all grid steps
                    pl.BlockSpec((I, 3 * Sp), lambda i: (0, 0), **wkw),
                    pl.BlockSpec((1, 3 * Sp), lambda i: (0, 0), **wkw),
                    pl.BlockSpec((S, 2 * Sp), lambda i: (0, 0), **wkw),
                    pl.BlockSpec((S, S), lambda i: (0, 0), **wkw),
                ],
                out_specs=pl.BlockSpec((TB, S), lambda i: (i, 0)),
            ),
            compiler_params=pltpu.CompilerParams(
                dimension_semantics=("parallel",),
                vmem_limit_bytes=_vmem_limit_bytes()),
        )

    args = (data, state, w_dg, b_fused, w_sg, w_h2h)
    try:
        # Constant-index weights single-buffered (saves VMEM, esp. on v7x).
        return build(True)(*args)
    except Exception:
        # Fallback for jax versions without BlockSpec pipeline_mode support.
        return build(False)(*args)


def init_params(key, state_dim, input_dim):
    """Deterministic synthetic parameters (PyTorch Linear shapes, transposed),
    plus the offline-fused, 128-lane-padded, bf16 weights the kernel uses."""
    k1, k2, k3, k4, k5, k6 = jax.random.split(key, 6)
    scale = 0.1
    S, I = state_dim, input_dim
    Sp = _round_up(S, 128)

    # nn.Linear(input_dim, state_dim): W [S, I] -> stored as [I, S]
    w_is = scale * jax.random.normal(k1, (I, S), jnp.float32)
    b_is = scale * jax.random.normal(k2, (1, S), jnp.float32)
    # nn.Linear(input_dim, 2*state_dim): [I, 2S]; chunk: [:, :S]=update, [:, S:]=reset
    w_ig = scale * jax.random.normal(k3, (I, 2 * S), jnp.float32)
    b_ig = scale * jax.random.normal(k4, (1, 2 * S), jnp.float32)
    # nn.Linear(state_dim, 2*state_dim, bias=False): [S, 2S]
    w_sg = scale * jax.random.normal(k5, (S, 2 * S), jnp.float32)
    # nn.Linear(state_dim, state_dim, bias=False): [S, S]
    w_h2h = scale * jax.random.normal(k6, (S, S), jnp.float32)

    def pad_cols(w):
        return jnp.pad(w, ((0, 0), (0, Sp - w.shape[1])))

    # Offline fusion of the three data-side projections, each gate block padded
    # to Sp columns so in-kernel slices land on 128-lane boundaries.
    w_dg = jnp.concatenate(
        [pad_cols(w_is), pad_cols(w_ig[:, :S]), pad_cols(w_ig[:, S:])],
        axis=1)                                                   # [I, 3*Sp]
    b_fused = jnp.concatenate(
        [pad_cols(b_is), pad_cols(b_ig[:, :S]), pad_cols(b_ig[:, S:])],
        axis=1)                                                   # [1, 3*Sp]
    w_sg_pad = jnp.concatenate(
        [pad_cols(w_sg[:, :S]), pad_cols(w_sg[:, S:])], axis=1)   # [S, 2*Sp]

    return {
        # original (f32) parameters, for the reference path
        "w_is": w_is, "b_is": b_is, "w_ig": w_ig, "b_ig": b_ig,
        "w_sg": w_sg, "w_h2h": w_h2h,
        # kernel-ready fused / padded / bf16 parameters
        "w_dg_bf16": w_dg.astype(jnp.bfloat16),
        "b_fused": b_fused,
        "w_sg_bf16": w_sg_pad.astype(jnp.bfloat16),
        "w_h2h_bf16": w_h2h.astype(jnp.bfloat16),
    }


def reference_forward(data, state, p):
    """Pure-JAX reference mirroring the PyTorch forward (un-fused layout).

    Matmul operands are cast to bf16 exactly like the kernel (deliberate
    precision choice); all gate math stays f32.
    """
    S = state.shape[1]
    d = data.astype(jnp.bfloat16)
    s = state.astype(jnp.bfloat16)
    input_state = jnp.dot(d, p["w_is"].astype(jnp.bfloat16),
                          preferred_element_type=jnp.float32) + p["b_is"]
    gate = (jnp.dot(d, p["w_ig"].astype(jnp.bfloat16),
                    preferred_element_type=jnp.float32) + p["b_ig"]
            + jnp.dot(s, p["w_sg"].astype(jnp.bfloat16),
                      preferred_element_type=jnp.float32))
    update_gate = jax.nn.sigmoid(gate[:, :S])
    reset_gate = jax.nn.sigmoid(gate[:, S:])
    state_hat = jnp.tanh(
        input_state + jnp.dot((state * reset_gate).astype(jnp.bfloat16),
                              p["w_h2h"].astype(jnp.bfloat16),
                              preferred_element_type=jnp.float32))
    return update_gate * state_hat + (1.0 - update_gate) * state


if __name__ == "__main__":
    batch = 8
    input_dim = 16
    state_dim = 32

    root = jax.random.PRNGKey(0)
    k_data, k_state, k_params = jax.random.split(root, 3)

    data = jax.random.normal(k_data, (batch, input_dim), jnp.float32)
    state = jax.random.normal(k_state, (batch, state_dim), jnp.float32)
    params = init_params(k_params, state_dim, input_dim)

    new_state = my_gru_transition(data, state, params)
    new_state = jax.block_until_ready(new_state)

    ref = reference_forward(data, state, params)
    assert new_state.shape == (batch, state_dim)
    assert new_state.dtype == jnp.float32
    assert jnp.allclose(new_state, ref, atol=1e-4, rtol=1e-4), (
        float(jnp.max(jnp.abs(new_state - ref))))

    print("KERNEL_OK")
</pallas_src>

<mosaic_0001>
module attributes {stable_mosaic.version = 11 : i64} {
  func.func @gru_transition_kernel(%arg0: i32, %arg1: memref<8x16xf32, #tpu.memory_space<vmem>>, %arg2: memref<8x32xf32, #tpu.memory_space<vmem>>, %arg3: memref<16x384xbf16, #tpu.memory_space<vmem>>, %arg4: memref<1x384xf32, #tpu.memory_space<vmem>>, %arg5: memref<32x256xbf16, #tpu.memory_space<vmem>>, %arg6: memref<32x32xbf16, #tpu.memory_space<vmem>>, %arg7: memref<8x32xf32, #tpu.memory_space<vmem>>) attributes {dimension_semantics = [#tpu.dimension_semantics<parallel>], iteration_bounds = array<i64: 1>, scalar_prefetch = 0 : i64, scratch_operands = 0 : i64, tpu.core_type = #tpu.core_type<tc>, window_params = [{transform_indices = @transform_0, window_bounds = array<i64: 8, 16>}, {transform_indices = @transform_1, window_bounds = array<i64: 8, 32>}, {pipeline_mode = #tpu.pipeline_mode<synchronous>, transform_indices = @transform_2, window_bounds = array<i64: 16, 384>}, {pipeline_mode = #tpu.pipeline_mode<synchronous>, transform_indices = @transform_3, window_bounds = array<i64: 1, 384>}, {pipeline_mode = #tpu.pipeline_mode<synchronous>, transform_indices = @transform_4, window_bounds = array<i64: 32, 256>}, {pipeline_mode = #tpu.pipeline_mode<synchronous>, transform_indices = @transform_5, window_bounds = array<i64: 32, 32>}, {transform_indices = @transform_6, window_bounds = array<i64: 8, 32>}]} {
    %c0 = arith.constant 0 : index
    %c0_0 = arith.constant 0 : index
    %0 = vector.load %arg2[%c0, %c0_0] : memref<8x32xf32, #tpu.memory_space<vmem>>, vector<8x32xf32>
    %c0_1 = arith.constant 0 : index
    %c0_2 = arith.constant 0 : index
    %1 = vector.load %arg1[%c0_1, %c0_2] : memref<8x16xf32, #tpu.memory_space<vmem>>, vector<8x16xf32>
    %2 = arith.truncf %1 : vector<8x16xf32> to vector<8x16xbf16>
    %3 = arith.truncf %0 : vector<8x32xf32> to vector<8x32xbf16>
    %c0_3 = arith.constant 0 : index
    %c0_4 = arith.constant 0 : index
    %4 = vector.load %arg3[%c0_3, %c0_4] : memref<16x384xbf16, #tpu.memory_space<vmem>>, vector<16x384xbf16>
    %cst = arith.constant dense<0.000000e+00> : vector<8x384xf32>
    %5 = tpu.matmul %2, %4, %cst {dimension_numbers = #tpu.dot_dimension_numbers<[1], [0], [0], [1], [0, 0, 1, 1], [], []>} : vector<8x16xbf16>, vector<16x384xbf16>, vector<8x384xf32> -> vector<8x384xf32>
    %c0_5 = arith.constant 0 : index
    %c0_6 = arith.constant 0 : index
    %6 = vector.load %arg4[%c0_5, %c0_6] : memref<1x384xf32, #tpu.memory_space<vmem>>, vector<1x384xf32>
    %7 = vector.broadcast %6 : vector<1x384xf32> to vector<8x384xf32>
    %8 = arith.addf %5, %7 : vector<8x384xf32>
    %c0_7 = arith.constant 0 : index
    %c0_8 = arith.constant 0 : index
    %9 = vector.load %arg5[%c0_7, %c0_8] : memref<32x256xbf16, #tpu.memory_space<vmem>>, vector<32x256xbf16>
    %cst_9 = arith.constant dense<0.000000e+00> : vector<8x256xf32>
    %10 = tpu.matmul %3, %9, %cst_9 {dimension_numbers = #tpu.dot_dimension_numbers<[1], [0], [0], [1], [0, 0, 1, 1], [], []>} : vector<8x32xbf16>, vector<32x256xbf16>, vector<8x256xf32> -> vector<8x256xf32>
    %11 = vector.extract_strided_slice %8 {offsets = [0, 0], sizes = [8, 32], strides = [1, 1]} : vector<8x384xf32> to vector<8x32xf32>
    %12 = vector.extract_strided_slice %8 {offsets = [0, 128], sizes = [8, 32], strides = [1, 1]} : vector<8x384xf32> to vector<8x32xf32>
    %13 = vector.extract_strided_slice %10 {offsets = [0, 0], sizes = [8, 32], strides = [1, 1]} : vector<8x256xf32> to vector<8x32xf32>
    %14 = arith.addf %12, %13 : vector<8x32xf32>
    %15 = arith.negf %14 : vector<8x32xf32>
    %16 = math.exp %15 : vector<8x32xf32>
    %cst_10 = arith.constant 1.000000e+00 : f32
    %17 = vector.broadcast %cst_10 : f32 to vector<8x32xf32>
    %18 = arith.addf %17, %16 : vector<8x32xf32>
    %19 = arith.divf %17, %18 : vector<8x32xf32>
    %20 = vector.extract_strided_slice %8 {offsets = [0, 256], sizes = [8, 32], strides = [1, 1]} : vector<8x384xf32> to vector<8x32xf32>
    %21 = vector.extract_strided_slice %10 {offsets = [0, 128], sizes = [8, 32], strides = [1, 1]} : vector<8x256xf32> to vector<8x32xf32>
    %22 = arith.addf %20, %21 : vector<8x32xf32>
    %23 = arith.negf %22 : vector<8x32xf32>
    %24 = math.exp %23 : vector<8x32xf32>
    %cst_11 = arith.constant 1.000000e+00 : f32
    %25 = vector.broadcast %cst_11 : f32 to vector<8x32xf32>
    %26 = arith.addf %25, %24 : vector<8x32xf32>
    %27 = arith.divf %25, %26 : vector<8x32xf32>
    %28 = arith.mulf %0, %27 : vector<8x32xf32>
    %29 = arith.truncf %28 : vector<8x32xf32> to vector<8x32xbf16>
    %c0_12 = arith.constant 0 : index
    %c0_13 = arith.constant 0 : index
    %30 = vector.load %arg6[%c0_12, %c0_13] : memref<32x32xbf16, #tpu.memory_space<vmem>>, vector<32x32xbf16>
    %cst_14 = arith.constant dense<0.000000e+00> : vector<8x32xf32>
    %31 = tpu.matmul %29, %30, %cst_14 {dimension_numbers = #tpu.dot_dimension_numbers<[1], [0], [0], [1], [0, 0, 1, 1], [], []>} : vector<8x32xbf16>, vector<32x32xbf16>, vector<8x32xf32> -> vector<8x32xf32>
    %32 = arith.addf %11, %31 : vector<8x32xf32>
    %33 = math.tanh %32 : vector<8x32xf32>
    %34 = arith.subf %33, %0 : vector<8x32xf32>
    %35 = arith.mulf %19, %34 : vector<8x32xf32>
    %36 = arith.addf %0, %35 : vector<8x32xf32>
    %c0_15 = arith.constant 0 : index
    %c0_16 = arith.constant 0 : index
    %37 = vector.load %arg7[%c0_15, %c0_16] : memref<8x32xf32, #tpu.memory_space<vmem>>, vector<8x32xf32>
    tpu.vector_store %arg7[%c0_15, %c0_16], %36 {strides = array<i32>} : memref<8x32xf32, #tpu.memory_space<vmem>>, vector<8x32xf32>,
    return
  }
  func.func @transform_0(%arg0: i32) -> (i32, i32) {
    %c0_i32 = arith.constant 0 : i32
    %c0_i32_0 = arith.constant 0 : i32
    return %arg0, %c0_i32 : i32, i32
  }
  func.func @transform_1(%arg0: i32) -> (i32, i32) {
    %c0_i32 = arith.constant 0 : i32
    %c0_i32_0 = arith.constant 0 : i32
    return %arg0, %c0_i32 : i32, i32
  }
  func.func @transform_2(%arg0: i32) -> (i32, i32) {
    %c0_i32 = arith.constant 0 : i32
    %c0_i32_0 = arith.constant 0 : i32
    %c0_i32_1 = arith.constant 0 : i32
    return %c0_i32, %c0_i32_0 : i32, i32
  }
  func.func @transform_3(%arg0: i32) -> (i32, i32) {
    %c0_i32 = arith.constant 0 : i32
    %c0_i32_0 = arith.constant 0 : i32
    %c0_i32_1 = arith.constant 0 : i32
    return %c0_i32, %c0_i32_0 : i32, i32
  }
  func.func @transform_4(%arg0: i32) -> (i32, i32) {
    %c0_i32 = arith.constant 0 : i32
    %c0_i32_0 = arith.constant 0 : i32
    %c0_i32_1 = arith.constant 0 : i32
    return %c0_i32, %c0_i32_0 : i32, i32
  }
  func.func @transform_5(%arg0: i32) -> (i32, i32) {
    %c0_i32 = arith.constant 0 : i32
    %c0_i32_0 = arith.constant 0 : i32
    %c0_i32_1 = arith.constant 0 : i32
    return %c0_i32, %c0_i32_0 : i32, i32
  }
  func.func @transform_6(%arg0: i32) -> (i32, i32) {
    %c0_i32 = arith.constant 0 : i32
    %c0_i32_0 = arith.constant 0 : i32
    return %arg0, %c0_i32 : i32, i32
  }
}

module attributes {stable_mosaic.version = 11 : i64} {
  func.func @gru_transition_kernel(%arg0: i32, %arg1: memref<8x16xf32, #tpu.memory_space<vmem>>, %arg2: memref<8x32xf32, #tpu.memory_space<vmem>>, %arg3: memref<16x384xbf16, #tpu.memory_space<vmem>>, %arg4: memref<1x384xf32, #tpu.memory_space<vmem>>, %arg5: memref<32x256xbf16, #tpu.memory_space<vmem>>, %arg6: memref<32x32xbf16, #tpu.memory_space<vmem>>, %arg7: memref<8x32xf32, #tpu.memory_space<vmem>>) attributes {dimension_semantics = [#tpu.dimension_semantics<parallel>], iteration_bounds = array<i64: 1>, scalar_prefetch = 0 : i64, scratch_operands = 0 : i64, tpu.core_type = #tpu.core_type<tc>, window_params = [{transform_indices = @transform_0, window_bounds = array<i64: 8, 16>}, {transform_indices = @transform_1, window_bounds = array<i64: 8, 32>}, {pipeline_mode = #tpu.pipeline_mode<synchronous>, transform_indices = @transform_2, window_bounds = array<i64: 16, 384>}, {pipeline_mode = #tpu.pipeline_mode<synchronous>, transform_indices = @transform_3, window_bounds = array<i64: 1, 384>}, {pipeline_mode = #tpu.pipeline_mode<synchronous>, transform_indices = @transform_4, window_bounds = array<i64: 32, 256>}, {pipeline_mode = #tpu.pipeline_mode<synchronous>, transform_indices = @transform_5, window_bounds = array<i64: 32, 32>}, {transform_indices = @transform_6, window_bounds = array<i64: 8, 32>}]} {
    %c0 = arith.constant 0 : index
    %c0_0 = arith.constant 0 : index
    %0 = vector.load %arg2[%c0, %c0_0] : memref<8x32xf32, #tpu.memory_space<vmem>>, vector<8x32xf32>
    %c0_1 = arith.constant 0 : index
    %c0_2 = arith.constant 0 : index
    %1 = vector.load %arg1[%c0_1, %c0_2] : memref<8x16xf32, #tpu.memory_space<vmem>>, vector<8x16xf32>
    %2 = arith.truncf %1 : vector<8x16xf32> to vector<8x16xbf16>
    %3 = arith.truncf %0 : vector<8x32xf32> to vector<8x32xbf16>
    %c0_3 = arith.constant 0 : index
    %c0_4 = arith.constant 0 : index
    %4 = vector.load %arg3[%c0_3, %c0_4] : memref<16x384xbf16, #tpu.memory_space<vmem>>, vector<16x384xbf16>
    %cst = arith.constant dense<0.000000e+00> : vector<8x384xf32>
    %5 = tpu.matmul %2, %4, %cst {dimension_numbers = #tpu.dot_dimension_numbers<[1], [0], [0], [1], [0, 0, 1, 1], [], []>} : vector<8x16xbf16>, vector<16x384xbf16>, vector<8x384xf32> -> vector<8x384xf32>
    %c0_5 = arith.constant 0 : index
    %c0_6 = arith.constant 0 : index
    %6 = vector.load %arg4[%c0_5, %c0_6] : memref<1x384xf32, #tpu.memory_space<vmem>>, vector<1x384xf32>
    %7 = vector.broadcast %6 : vector<1x384xf32> to vector<8x384xf32>
    %8 = arith.addf %5, %7 : vector<8x384xf32>
    %c0_7 = arith.constant 0 : index
    %c0_8 = arith.constant 0 : index
    %9 = vector.load %arg5[%c0_7, %c0_8] : memref<32x256xbf16, #tpu.memory_space<vmem>>, vector<32x256xbf16>
    %cst_9 = arith.constant dense<0.000000e+00> : vector<8x256xf32>
    %10 = tpu.matmul %3, %9, %cst_9 {dimension_numbers = #tpu.dot_dimension_numbers<[1], [0], [0], [1], [0, 0, 1, 1], [], []>} : vector<8x32xbf16>, vector<32x256xbf16>, vector<8x256xf32> -> vector<8x256xf32>
    %11 = vector.extract_strided_slice %8 {offsets = [0, 0], sizes = [8, 32], strides = [1, 1]} : vector<8x384xf32> to vector<8x32xf32>
    %12 = vector.extract_strided_slice %8 {offsets = [0, 128], sizes = [8, 32], strides = [1, 1]} : vector<8x384xf32> to vector<8x32xf32>
    %13 = vector.extract_strided_slice %10 {offsets = [0, 0], sizes = [8, 32], strides = [1, 1]} : vector<8x256xf32> to vector<8x32xf32>
    %14 = arith.addf %12, %13 : vector<8x32xf32>
    %15 = arith.negf %14 : vector<8x32xf32>
    %16 = math.exp %15 : vector<8x32xf32>
    %cst_10 = arith.constant 1.000000e+00 : f32
    %17 = vector.broadcast %cst_10 : f32 to vector<8x32xf32>
    %18 = arith.addf %17, %16 : vector<8x32xf32>
    %19 = arith.divf %17, %18 : vector<8x32xf32>
    %20 = vector.extract_strided_slice %8 {offsets = [0, 256], sizes = [8, 32], strides = [1, 1]} : vector<8x384xf32> to vector<8x32xf32>
    %21 = vector.extract_strided_slice %10 {offsets = [0, 128], sizes = [8, 32], strides = [1, 1]} : vector<8x256xf32> to vector<8x32xf32>
    %22 = arith.addf %20, %21 : vector<8x32xf32>
    %23 = arith.negf %22 : vector<8x32xf32>
    %24 = math.exp %23 : vector<8x32xf32>
    %cst_11 = arith.constant 1.000000e+00 : f32
    %25 = vector.broadcast %cst_11 : f32 to vector<8x32xf32>
    %26 = arith.addf %25, %24 : vector<8x32xf32>
    %27 = arith.divf %25, %26 : vector<8x32xf32>
    %28 = arith.mulf %0, %27 : vector<8x32xf32>
    %29 = arith.truncf %28 : vector<8x32xf32> to vector<8x32xbf16>
    %c0_12 = arith.constant 0 : index
    %c0_13 = arith.constant 0 : index
    %30 = vector.load %arg6[%c0_12, %c0_13] : memref<32x32xbf16, #tpu.memory_space<vmem>>, vector<32x32xbf16>
    %cst_14 = arith.constant dense<0.000000e+00> : vector<8x32xf32>
    %31 = tpu.matmul %29, %30, %cst_14 {dimension_numbers = #tpu.dot_dimension_numbers<[1], [0], [0], [1], [0, 0, 1, 1], [], []>} : vector<8x32xbf16>, vector<32x32xbf16>, vector<8x32xf32> -> vector<8x32xf32>
    %32 = arith.addf %11, %31 : vector<8x32xf32>
    %33 = math.tanh %32 : vector<8x32xf32>
    %34 = arith.subf %33, %0 : vector<8x32xf32>
    %35 = arith.mulf %19, %34 : vector<8x32xf32>
    %36 = arith.addf %0, %35 : vector<8x32xf32>
    %c0_15 = arith.constant 0 : index
    %c0_16 = arith.constant 0 : index
    %37 = vector.load %arg7[%c0_15, %c0_16] : memref<8x32xf32, #tpu.memory_space<vmem>>, vector<8x32xf32>
    tpu.vector_store %arg7[%c0_15, %c0_16], %36 {strides = array<i32>} : memref<8x32xf32, #tpu.memory_space<vmem>>, vector<8x32xf32>,
    return
  }
  func.func @transform_0(%arg0: i32) -> (i32, i32) {
    %c0_i32 = arith.constant 0 : i32
    %c0_i32_0 = arith.constant 0 : i32
    return %arg0, %c0_i32 : i32, i32
  }
  func.func @transform_1(%arg0: i32) -> (i32, i32) {
    %c0_i32 = arith.constant 0 : i32
    %c0_i32_0 = arith.constant 0 : i32
    return %arg0, %c0_i32 : i32, i32
  }
  func.func @transform_2(%arg0: i32) -> (i32, i32) {
    %c0_i32 = arith.constant 0 : i32
    %c0_i32_0 = arith.constant 0 : i32
    %c0_i32_1 = arith.constant 0 : i32
    return %c0_i32, %c0_i32_0 : i32, i32
  }
  func.func @transform_3(%arg0: i32) -> (i32, i32) {
    %c0_i32 = arith.constant 0 : i32
    %c0_i32_0 = arith.constant 0 : i32
    %c0_i32_1 = arith.constant 0 : i32
    return %c0_i32, %c0_i32_0 : i32, i32
  }
  func.func @transform_4(%arg0: i32) -> (i32, i32) {
    %c0_i32 = arith.constant 0 : i32
    %c0_i32_0 = arith.constant 0 : i32
    %c0_i32_1 = arith.constant 0 : i32
    return %c0_i32, %c0_i32_0 : i32, i32
  }
  func.func @transform_5(%arg0: i32) -> (i32, i32) {
    %c0_i32 = arith.constant 0 : i32
    %c0_i32_0 = arith.constant 0 : i32
    %c0_i32_1 = arith.constant 0 : i32
    return %c0_i32, %c0_i32_0 : i32, i32
  }
  func.func @transform_6(%arg0: i32) -> (i32, i32) {
    %c0_i32 = arith.constant 0 : i32
    %c0_i32_0 = arith.constant 0 : i32
    return %arg0, %c0_i32 : i32, i32
  }
}

</mosaic_0001>

<llo_original>
// kernel: tpu_custom_call.1
$region0: #{tpu_custom_call.1}
  #allocation0 [shape = 'u32[]', space=smem, size = 0x4, offset = 0x4, fixed_abs, tag = 'smem constant byte address 0x4 - core index']
  #allocation1 [shape = 'u32[144,128]{1,0:T(1,128)}', space=vmem, size = 0x12000, scoped, tag = 'internal scratch']
  %s0 = inlined_call_operand.hbm [shape: f32[8,16], index: 0, kind: input, shape index: {}]
  %s1 = inlined_call_operand.hbm [shape: f32[8,32], index: 1, kind: input, shape index: {}]
  %s2 = inlined_call_operand.hbm [shape: bf16[16,384], index: 2, kind: input, shape index: {}]
  %s3 = inlined_call_operand.hbm [shape: f32[1,384], index: 3, kind: input, shape index: {}]
  %s4 = inlined_call_operand.hbm [shape: bf16[32,256], index: 4, kind: input, shape index: {}]
  %s5 = inlined_call_operand.hbm [shape: bf16[32,32], index: 5, kind: input, shape index: {}]
  %s6 = inlined_call_operand.hbm [shape: f32[8,32], index: 6, kind: output, shape index: {}]
  %s7 = sld [smem:[#allocation0]]
  $region58: #{tpu_custom_call.1} parent=0
    _
  %s9 = ssub.s32 1, %s7
  %s10 = scalar_select 0, %s9, %s7
  $region1: #{tpu_custom_call.1} parent=0
    #allocation2 [shape = 'u8[4096]{0}', space=vmem, size = 0x1000, scoped, tag = 'input window, operand 0, single buffered']
    #allocation3 [shape = 's32[1]{0}', space=sflag, size = 0x4, scoped, tag = 'scoped memory for tpu_custom_call.1']
    #allocation4 [shape = 's32[1]{0}', space=sflag, size = 0x4, scoped, tag = 'scoped memory for tpu_custom_call.1']
    #allocation5 [shape = 'u8[4096]{0}', space=vmem, size = 0x1000, scoped, tag = 'input window, operand 1, single buffered']
    #allocation6 [shape = 's32[1]{0}', space=sflag, size = 0x4, scoped, tag = 'scoped memory for tpu_custom_call.1']
    #allocation7 [shape = 'u8[12288]{0}', space=vmem, size = 0x3000, scoped, tag = 'input window, operand 2, single buffered']
    #allocation8 [shape = 'u8[1536]{0}', space=vmem, size = 0x800, scoped, tag = 'input window, operand 3, single buffered']
    #allocation9 [shape = 's32[1]{0}', space=sflag, size = 0x4, scoped, tag = 'scoped memory for tpu_custom_call.1']
    #allocation10 [shape = 'u8[16384]{0}', space=vmem, size = 0x4000, scoped, tag = 'input window, operand 4, single buffered']
    #allocation11 [shape = 'u8[8192]{0}', space=vmem, size = 0x2000, scoped, tag = 'input window, operand 5, single buffered']
    #allocation12 [shape = 's32[1]{0}', space=sflag, size = 0x4, scoped, tag = 'scoped memory for tpu_custom_call.1']
    #allocation13 [shape = 'u8[4096]{0}', space=vmem, size = 0x1000, scoped, tag = 'output window, operand 0, single buffered']
    %11 = vsyncpa [#allocation3], 0
    %12 = vsyncpa [#allocation6], 0
    %13 = vsyncpa [#allocation9], 0
    %14 = vsyncpa [#allocation12], 0
    %15 = vsyncpa [#allocation4], 0
    // Predicated region
    $region2: #{tpu_custom_call.1} parent=1 // pred_check
      _
    $region3: #{tpu_custom_call.1} parent=1 // pred_check_branch
      %17 = sbr.rel (0) target = $region5
    $region4: #{tpu_custom_call.1} parent=1 // pred_region
      %s19 = ssub.s32 128, 128
      %20 = vsyncadd [#allocation3], %s19
      %s22 = sshll.u32 [#allocation2], 4
      %s23 = int_to_ptr.vmem [resolvable:$true] %s22
      %25 = dma.hbm_to_vmem [thread:$0]  %s0, 128, %s23, [#allocation3]
    $region5: #{tpu_custom_call.1} parent=1 // pred_fallthru
      _
    // Predicated region
    $region6: #{tpu_custom_call.1} parent=1 // pred_check
      _
    $region7: #{tpu_custom_call.1} parent=1 // pred_check_branch
      %27 = sbr.rel (0) target = $region9
    $region8: #{tpu_custom_call.1} parent=1 // pred_region
      %s29 = ssub.s32 128, 128
      %30 = vsyncadd [#allocation6], %s29
      %s32 = sshll.u32 [#allocation5], 4
      %s33 = int_to_ptr.vmem [resolvable:$true] %s32
      %35 = dma.hbm_to_vmem [thread:$0]  %s1, 128, %s33, [#allocation6]
    $region9: #{tpu_custom_call.1} parent=1 // pred_fallthru
      _
    // Predicated region
    $region10: #{tpu_custom_call.1} parent=1 // pred_check
      _
    $region11: #{tpu_custom_call.1} parent=1 // pred_check_branch
      %37 = sbr.rel (0) target = $region13
    $region12: #{tpu_custom_call.1} parent=1 // pred_region
      %s39 = ssub.s32 384, 384
      %40 = vsyncadd [#allocation6], %s39
      %s41 = sshll.u32 [#allocation7], 4
      %s42 = int_to_ptr.vmem [resolvable:$true] %s41
      %47 = dma.hbm_to_vmem [thread:$0]  %s2, 384, %s42, [#allocation6], 192, 192, 12
    $region13: #{tpu_custom_call.1} parent=1 // pred_fallthru
      _
    // Predicated region
    $region14: #{tpu_custom_call.1} parent=1 // pred_check
      _
    $region15: #{tpu_custom_call.1} parent=1 // pred_check_branch
      %49 = sbr.rel (0) target = $region17
    $region16: #{tpu_custom_call.1} parent=1 // pred_region
      %s51 = ssub.s32 48, 48
      %52 = vsyncadd [#allocation9], %s51
      %s54 = sshll.u32 [#allocation8], 4
      %s55 = int_to_ptr.vmem [resolvable:$true] %s54
      %57 = dma.hbm_to_vmem [thread:$0]  %s3, 48, %s55, [#allocation9]
    $region17: #{tpu_custom_call.1} parent=1 // pred_fallthru
      _
    // Predicated region
    $region18: #{tpu_custom_call.1} parent=1 // pred_check
      _
    $region19: #{tpu_custom_call.1} parent=1 // pred_check_branch
      %59 = sbr.rel (0) target = $region21
    $region20: #{tpu_custom_call.1} parent=1 // pred_region
      %s61 = ssub.s32 512, 512
      %62 = vsyncadd [#allocation9], %s61
      %s63 = sshll.u32 [#allocation10], 4
      %s64 = int_to_ptr.vmem [resolvable:$true] %s63
      %69 = dma.hbm_to_vmem [thread:$0]  %s4, 512, %s64, [#allocation9], 128, 128, 8
    $region21: #{tpu_custom_call.1} parent=1 // pred_fallthru
      _
    // Predicated region
    $region22: #{tpu_custom_call.1} parent=1 // pred_check
      _
    $region23: #{tpu_custom_call.1} parent=1 // pred_check_branch
      %71 = sbr.rel (0) target = $region25
    $region24: #{tpu_custom_call.1} parent=1 // pred_region
      %s73 = ssub.s32 256, 256
      %74 = vsyncadd [#allocation12], %s73
      %s75 = sshll.u32 [#allocation11], 4
      %s76 = int_to_ptr.vmem [resolvable:$true] %s75
      %81 = dma.hbm_to_vmem [thread:$0]  %s5, 256, %s76, [#allocation12], 64, 64, 4
    $region25: #{tpu_custom_call.1} parent=1 // pred_fallthru
      _
    // Predicated region
    $region26: #{tpu_custom_call.1} parent=1 // pred_check
      _
    $region27: #{tpu_custom_call.1} parent=1 // pred_check_branch
      %83 = sbr.rel (0) target = $region29
    $region28: #{tpu_custom_call.1} parent=1 // pred_region
      %84 = dma.done [#allocation3], 128
    $region29: #{tpu_custom_call.1} parent=1 // pred_fallthru
      _
    // Predicated region
    $region30: #{tpu_custom_call.1} parent=1 // pred_check
      _
    $region31: #{tpu_custom_call.1} parent=1 // pred_check_branch
      %86 = sbr.rel (0) target = $region33
    $region32: #{tpu_custom_call.1} parent=1 // pred_region
      %87 = dma.done [#allocation6], 128
    $region33: #{tpu_custom_call.1} parent=1 // pred_fallthru
      _
    // Predicated region
    $region34: #{tpu_custom_call.1} parent=1 // pred_check
      _
    $region35: #{tpu_custom_call.1} parent=1 // pred_check_branch
      %89 = sbr.rel (0) target = $region37
    $region36: #{tpu_custom_call.1} parent=1 // pred_region
      %90 = dma.done [#allocation6], 384
    $region37: #{tpu_custom_call.1} parent=1 // pred_fallthru
      _
    // Predicated region
    $region38: #{tpu_custom_call.1} parent=1 // pred_check
      _
    $region39: #{tpu_custom_call.1} parent=1 // pred_check_branch
      %92 = sbr.rel (0) target = $region41
    $region40: #{tpu_custom_call.1} parent=1 // pred_region
      %93 = dma.done [#allocation9], 48
    $region41: #{tpu_custom_call.1} parent=1 // pred_fallthru
      _
    // Predicated region
    $region42: #{tpu_custom_call.1} parent=1 // pred_check
      _
    $region43: #{tpu_custom_call.1} parent=1 // pred_check_branch
      %95 = sbr.rel (0) target = $region45
    $region44: #{tpu_custom_call.1} parent=1 // pred_region
      %96 = dma.done [#allocation9], 512
    $region45: #{tpu_custom_call.1} parent=1 // pred_fallthru
      _
    // Predicated region
    $region46: #{tpu_custom_call.1} parent=1 // pred_check
      _
    $region47: #{tpu_custom_call.1} parent=1 // pred_check_branch
      %98 = sbr.rel (0) target = $region49
    $region48: #{tpu_custom_call.1} parent=1 // pred_region
      %99 = dma.done [#allocation12], 256
    $region49: #{tpu_custom_call.1} parent=1 // pred_fallthru
      _
    %v101 = vld [vmem:[#allocation5] sm:$0xff]
    %v102 = vld [vmem:[#allocation2] sm:$0xff]
    %v103 = vpack.c.bf16 %v102, %v102
    %v104 = vpack.c.bf16 %v101, %v101
    %v105 = vld [vmem:[#allocation7] sm:$0xff]
    %v106 = vld [vmem:[#allocation7 + $0x8] sm:$0xf]
    %v107 = vld [vmem:[#allocation7 + $0xc] sm:$0xff]
    %v108 = vld [vmem:[#allocation7 + $0x14] sm:$0xf]
    %v109 = vld [vmem:[#allocation8] sm:$0x7]
    %v111 = vlaneseq
    %v112 = vshrl.u32 %v111, 7
    %v113 = vsub.s32 0, %v112
    %v114 = vrot.slane %v109, %v113
    %v115 = vlaneseq
    %v116 = vshrl.u32 %v115, 7
    %v117 = vsub.s32 1, %v116
    %v118 = vrot.slane %v109, %v117
    %v119 = vlaneseq
    %v120 = vshrl.u32 %v119, 7
    %v121 = vsub.s32 2, %v120
    %v122 = vrot.slane %v109, %v121
    %v130 = vunpack.c.l.b16 %v105
    %v131 = vunpack.c.h.b16 %v105
    %v132 = vunpack.c.l.b16 %v106
    %v133 = vunpack.c.l.b16 %v107
    %v134 = vunpack.c.h.b16 %v107
    %v135 = vunpack.c.l.b16 %v108
    %v136 = vpack.c.b16 %v133, %v130
    %v137 = vpack.c.b16 %v134, %v131
    %v138 = vpack.c.b16 %v135, %v132
    %vm142 = vcmask 130048
    %v144 = vsel %vm142, %v103, 0
    %146 = vmatprep.subr.bf16.mxu0 %v137
    %147 = vmatpush1.bf16.msra.mxu0 %v136
    %148 = vmatprep.subr.bf16.mxu0 0
    %149 = vmatpush1.bf16.msra.mxu0 0
    %150 = vmatprep.subr.bf16.mxu0 0
    %151 = vmatpush1.bf16.msra.mxu0 0
    %152 = vmatprep.subr.bf16.mxu0 0
    %153 = vmatpush1.bf16.msra.mxu0 0
    %154 = vmatprep.subr.bf16.mxu0 0
    %155 = vmatpush1.bf16.msra.mxu0 0
    %156 = vmatprep.subr.bf16.mxu0 0
    %157 = vmatpush1.bf16.msra.mxu0 0
    %158 = vmatprep.subr.bf16.mxu0 0
    %159 = vmatpush1.bf16.msra.mxu0 0
    %160 = vmatprep.subr.bf16.mxu0 0
    %161 = vmatpush1.bf16.msra.mxu0 0
    %162 = vmatprep.subr.bf16.mxu0 0
    %163 = vmatpush1.bf16.msra.mxu0 0
    %164 = vmatprep.subr.bf16.mxu0 0
    %165 = vmatpush1.bf16.msra.mxu0 0
    %166 = vmatprep.subr.bf16.mxu0 0
    %167 = vmatpush1.bf16.msra.mxu0 0
    %168 = vmatprep.subr.bf16.mxu0 0
    %169 = vmatpush1.bf16.msra.mxu0 0
    %170 = vmatprep.subr.bf16.mxu0 0
    %171 = vmatpush1.bf16.msra.mxu0 0
    %172 = vmatprep.subr.bf16.mxu0 0
    %173 = vmatpush1.bf16.msra.mxu0 0
    %174 = vmatprep.subr.bf16.mxu0 0
    %175 = vmatpush1.bf16.msra.mxu0 0
    %176 = vmatprep.subr.bf16.mxu0 0
    %177 = vmatpush1.bf16.msra.mxu0 0
    %178 = vmatprep.mubr.bf16.mxu0 0
    %179 = vmatmul.mubr.bf16.gmra.mrb[0].mxu0 %v144
    %v180 = vpop.f32.mrb[0].mxu0
    %v181 = vadd.f32 %v114, %v180
    %v182 = vpop.f32.mrb[0].mxu0
    %v183 = vadd.f32 %v118, %v182
    %v184 = vpop.f32.mrb[0].mxu0
    %v185 = vpop.f32.mrb[0].mxu0
    %186 = vdwg.mxu0
    %187 = vmatprep.subr.bf16.mxu0 0
    %188 = vmatpush1.bf16.msra.mxu0 %v138
    %189 = vmatprep.subr.bf16.mxu0 0
    %190 = vmatpush1.bf16.msra.mxu0 0
    %191 = vmatprep.subr.bf16.mxu0 0
    %192 = vmatpush1.bf16.msra.mxu0 0
    %193 = vmatprep.subr.bf16.mxu0 0
    %194 = vmatpush1.bf16.msra.mxu0 0
    %195 = vmatprep.subr.bf16.mxu0 0
    %196 = vmatpush1.bf16.msra.mxu0 0
    %197 = vmatprep.subr.bf16.mxu0 0
    %198 = vmatpush1.bf16.msra.mxu0 0
    %199 = vmatprep.subr.bf16.mxu0 0
    %200 = vmatpush1.bf16.msra.mxu0 0
    %201 = vmatprep.subr.bf16.mxu0 0
    %202 = vmatpush1.bf16.msra.mxu0 0
    %203 = vmatprep.subr.bf16.mxu0 0
    %204 = vmatpush1.bf16.msra.mxu0 0
    %205 = vmatprep.subr.bf16.mxu0 0
    %206 = vmatpush1.bf16.msra.mxu0 0
    %207 = vmatprep.subr.bf16.mxu0 0
    %208 = vmatpush1.bf16.msra.mxu0 0
    %209 = vmatprep.subr.bf16.mxu0 0
    %210 = vmatpush1.bf16.msra.mxu0 0
    %211 = vmatprep.subr.bf16.mxu0 0
    %212 = vmatpush1.bf16.msra.mxu0 0
    %213 = vmatprep.subr.bf16.mxu0 0
    %214 = vmatpush1.bf16.msra.mxu0 0
    %215 = vmatprep.subr.bf16.mxu0 0
    %216 = vmatpush1.bf16.msra.mxu0 0
    %217 = vmatprep.subr.bf16.mxu0 0
    %218 = vmatpush1.bf16.msra.mxu0 0
    %219 = vmatprep.mubr.bf16.mxu0 0
    %220 = vmatmul.mubr.bf16.gmra.mrb[0].mxu0 %v144
    %v221 = vpop.f32.mrb[0].mxu0
    %v222 = vadd.f32 %v122, %v221
    %v223 = vpop.f32.mrb[0].mxu0
    %v224 = vpop.f32.mrb[0].mxu0
    %v225 = vpop.f32.mrb[0].mxu0
    %226 = vdwg.mxu0
    %v227 = vld [vmem:[#allocation10] sm:$0xff]
    %v228 = vld [vmem:[#allocation10 + $0x8] sm:$0xff]
    %v229 = vld [vmem:[#allocation10 + $0x10] sm:$0xff]
    %v230 = vld [vmem:[#allocation10 + $0x18] sm:$0xff]
    %v235 = vunpack.c.l.b16 %v227
    %v236 = vunpack.c.h.b16 %v227
    %v237 = vunpack.c.l.b16 %v228
    %v238 = vunpack.c.h.b16 %v228
    %v239 = vunpack.c.l.b16 %v229
    %v240 = vunpack.c.h.b16 %v229
    %v241 = vunpack.c.l.b16 %v230
    %v242 = vunpack.c.h.b16 %v230
    %v243 = vpack.c.b16 %v237, %v235
    %v244 = vpack.c.b16 %v238, %v236
    %v245 = vpack.c.b16 %v241, %v239
    %v246 = vpack.c.b16 %v242, %v240
    %vm251 = vcmask 261120
    %v253 = vsel %vm251, %v104, 0
    %255 = vmatprep.subr.bf16.mxu0 %v244
    %256 = vmatpush1.bf16.msra.mxu0 %v243
    %257 = vmatprep.subr.bf16.mxu0 %v246
    %258 = vmatpush1.bf16.msra.mxu0 %v245
    %259 = vmatprep.subr.bf16.mxu0 0
    %260 = vmatpush1.bf16.msra.mxu0 0
    %261 = vmatprep.subr.bf16.mxu0 0
    %262 = vmatpush1.bf16.msra.mxu0 0
    %263 = vmatprep.subr.bf16.mxu0 0
    %264 = vmatpush1.bf16.msra.mxu0 0
    %265 = vmatprep.subr.bf16.mxu0 0
    %266 = vmatpush1.bf16.msra.mxu0 0
    %267 = vmatprep.subr.bf16.mxu0 0
    %268 = vmatpush1.bf16.msra.mxu0 0
    %269 = vmatprep.subr.bf16.mxu0 0
    %270 = vmatpush1.bf16.msra.mxu0 0
    %271 = vmatprep.subr.bf16.mxu0 0
    %272 = vmatpush1.bf16.msra.mxu0 0
    %273 = vmatprep.subr.bf16.mxu0 0
    %274 = vmatpush1.bf16.msra.mxu0 0
    %275 = vmatprep.subr.bf16.mxu0 0
    %276 = vmatpush1.bf16.msra.mxu0 0
    %277 = vmatprep.subr.bf16.mxu0 0
    %278 = vmatpush1.bf16.msra.mxu0 0
    %279 = vmatprep.subr.bf16.mxu0 0
    %280 = vmatpush1.bf16.msra.mxu0 0
    %281 = vmatprep.subr.bf16.mxu0 0
    %282 = vmatpush1.bf16.msra.mxu0 0
    %283 = vmatprep.subr.bf16.mxu0 0
    %284 = vmatpush1.bf16.msra.mxu0 0
    %285 = vmatprep.subr.bf16.mxu0 0
    %286 = vmatpush1.bf16.msra.mxu0 0
    %287 = vmatprep.mubr.bf16.mxu0 0
    %288 = vmatmul.mubr.bf16.gmra.mrb[0].mxu0 %v253
    %v289 = vpop.f32.mrb[0].mxu0
    %v290 = vadd.f32 0.0, %v289
    %v291 = vpop.f32.mrb[0].mxu0
    %v292 = vadd.f32 0.0, %v291
    %v293 = vpop.f32.mrb[0].mxu0
    %v294 = vpop.f32.mrb[0].mxu0
    %295 = vdwg.mxu0
    %v296 = vadd.f32 %v183, %v290
    %v297 = vxor.u32 %v296, 2147483648
    %v298 = vmul.f32 %v297, 1.442695
    %v299 = vpow.pop %v298
    %v300 = vadd.f32 %v299, 1.0
    %v301 = vrcp.pop %v300
    %v302 = vmul.f32 1.0, %v301
    %v303 = vadd.f32 %v222, %v292
    %v304 = vxor.u32 %v303, 2147483648
    %v305 = vmul.f32 %v304, 1.442695
    %v306 = vpow.pop %v305
    %v307 = vadd.f32 %v306, 1.0
    %v308 = vrcp.pop %v307
    %v309 = vmul.f32 1.0, %v308
    %v310 = vmul.f32 %v101, %v309
    %v311 = vpack.c.bf16 %v310, %v310
    %v312 = vld [vmem:[#allocation11] sm:$0xf]
    %v313 = vld [vmem:[#allocation11 + $0x4] sm:$0xf]
    %v314 = vld [vmem:[#allocation11 + $0x8] sm:$0xf]
    %v315 = vld [vmem:[#allocation11 + $0xc] sm:$0xf]
    %v320 = vunpack.c.l.b16 %v312
    %v321 = vunpack.c.l.b16 %v313
    %v322 = vunpack.c.l.b16 %v314
    %v323 = vunpack.c.l.b16 %v315
    %v324 = vpack.c.b16 %v321, %v320
    %v325 = vpack.c.b16 %v323, %v322
    %v329 = vsel %vm251, %v311, 0
    %331 = vmatprep.subr.bf16.mxu0 0
    %332 = vmatpush1.bf16.msra.mxu0 %v324
    %333 = vmatprep.subr.bf16.mxu0 0
    %334 = vmatpush1.bf16.msra.mxu0 %v325
    %335 = vmatprep.subr.bf16.mxu0 0
    %336 = vmatpush1.bf16.msra.mxu0 0
    %337 = vmatprep.subr.bf16.mxu0 0
    %338 = vmatpush1.bf16.msra.mxu0 0
    %339 = vmatprep.subr.bf16.mxu0 0
    %340 = vmatpush1.bf16.msra.mxu0 0
    %341 = vmatprep.subr.bf16.mxu0 0
    %342 = vmatpush1.bf16.msra.mxu0 0
    %343 = vmatprep.subr.bf16.mxu0 0
    %344 = vmatpush1.bf16.msra.mxu0 0
    %345 = vmatprep.subr.bf16.mxu0 0
    %346 = vmatpush1.bf16.msra.mxu0 0
    %347 = vmatprep.subr.bf16.mxu0 0
    %348 = vmatpush1.bf16.msra.mxu0 0
    %349 = vmatprep.subr.bf16.mxu0 0
    %350 = vmatpush1.bf16.msra.mxu0 0
    %351 = vmatprep.subr.bf16.mxu0 0
    %352 = vmatpush1.bf16.msra.mxu0 0
    %353 = vmatprep.subr.bf16.mxu0 0
    %354 = vmatpush1.bf16.msra.mxu0 0
    %355 = vmatprep.subr.bf16.mxu0 0
    %356 = vmatpush1.bf16.msra.mxu0 0
    %357 = vmatprep.subr.bf16.mxu0 0
    %358 = vmatpush1.bf16.msra.mxu0 0
    %359 = vmatprep.subr.bf16.mxu0 0
    %360 = vmatpush1.bf16.msra.mxu0 0
    %361 = vmatprep.subr.bf16.mxu0 0
    %362 = vmatpush1.bf16.msra.mxu0 0
    %363 = vmatprep.mubr.bf16.mxu0 0
    %364 = vmatmul.mubr.bf16.gmra.mrb[0].mxu0 %v329
    %v365 = vpop.f32.mrb[0].mxu0
    %v366 = vadd.f32 0.0, %v365
    %v367 = vpop.f32.mrb[0].mxu0
    %v368 = vpop.f32.mrb[0].mxu0
    %v369 = vpop.f32.mrb[0].mxu0
    %370 = vdwg.mxu0
    %v371 = vadd.f32 %v181, %v366
    %v372 = vtanh.pop %v371
    %v373 = vsub.f32 %v372, %v101
    %v374 = vmul.f32 %v302, %v373
    %v375 = vadd.f32 %v101, %v374
    %376 = vst.msk [vmem:[#allocation13] sm:$0xff] %vm251, %v375
    // Predicated region
    $region50: #{tpu_custom_call.1} parent=1 // pred_check
      _
    $region51: #{tpu_custom_call.1} parent=1 // pred_check_branch
      %378 = sbr.rel (0) target = $region53
    $region52: #{tpu_custom_call.1} parent=1 // pred_region
      %s380 = ssub.s32 128, 128
      %381 = vsyncadd [#allocation4], %s380
      %s383 = sshll.u32 [#allocation13], 4
      %s384 = int_to_ptr.vmem [resolvable:$true] %s383
      %386 = dma.vmem_to_hbm [thread:$0]  %s384, 128, %s6, [#allocation4]
    $region53: #{tpu_custom_call.1} parent=1 // pred_fallthru
      _
    // Predicated region
    $region54: #{tpu_custom_call.1} parent=1 // pred_check
      _
    $region55: #{tpu_custom_call.1} parent=1 // pred_check_branch
      %388 = sbr.rel (0) target = $region57
    $region56: #{tpu_custom_call.1} parent=1 // pred_region
      %389 = dma.done [#allocation4], 128
    $region57: #{tpu_custom_call.1} parent=1 // pred_fallthru
      _
    %390 = vsyncpa [#allocation3], 1
    %391 = vsyncpa [#allocation6], 1
    %392 = vsyncpa [#allocation9], 1
    %393 = vsyncpa [#allocation12], 1
    %394 = vsyncpa [#allocation4], 1

// kernel: tpu_custom_call.1
$region0: #{tpu_custom_call.1}
  #allocation0 [shape = 'u32[]', space=smem, size = 0x4, offset = 0x4, fixed_abs, tag = 'smem constant byte address 0x4 - core index']
  #allocation1 [shape = 'u32[144,128]{1,0:T(1,128)}', space=vmem, size = 0x12000, scoped, tag = 'internal scratch']
  %s0 = inlined_call_operand.hbm [shape: f32[8,16], index: 0, kind: input, shape index: {}]
  %s1 = inlined_call_operand.hbm [shape: f32[8,32], index: 1, kind: input, shape index: {}]
  %s2 = inlined_call_operand.hbm [shape: bf16[16,384], index: 2, kind: input, shape index: {}]
  %s3 = inlined_call_operand.hbm [shape: f32[1,384], index: 3, kind: input, shape index: {}]
  %s4 = inlined_call_operand.hbm [shape: bf16[32,256], index: 4, kind: input, shape index: {}]
  %s5 = inlined_call_operand.hbm [shape: bf16[32,32], index: 5, kind: input, shape index: {}]
  %s6 = inlined_call_operand.hbm [shape: f32[8,32], index: 6, kind: output, shape index: {}]
  %s7 = sld [smem:[#allocation0]]
  $region58: #{tpu_custom_call.1} parent=0
    _
  %s9 = ssub.s32 1, %s7
  %s10 = scalar_select 0, %s9, %s7
  $region1: #{tpu_custom_call.1} parent=0
    #allocation2 [shape = 'u8[4096]{0}', space=vmem, size = 0x1000, scoped, tag = 'input window, operand 0, single buffered']
    #allocation3 [shape = 's32[1]{0}', space=sflag, size = 0x4, scoped, tag = 'scoped memory for tpu_custom_call.1']
    #allocation4 [shape = 's32[1]{0}', space=sflag, size = 0x4, scoped, tag = 'scoped memory for tpu_custom_call.1']
    #allocation5 [shape = 'u8[4096]{0}', space=vmem, size = 0x1000, scoped, tag = 'input window, operand 1, single buffered']
    #allocation6 [shape = 's32[1]{0}', space=sflag, size = 0x4, scoped, tag = 'scoped memory for tpu_custom_call.1']
    #allocation7 [shape = 'u8[12288]{0}', space=vmem, size = 0x3000, scoped, tag = 'input window, operand 2, single buffered']
    #allocation8 [shape = 'u8[1536]{0}', space=vmem, size = 0x800, scoped, tag = 'input window, operand 3, single buffered']
    #allocation9 [shape = 's32[1]{0}', space=sflag, size = 0x4, scoped, tag = 'scoped memory for tpu_custom_call.1']
    #allocation10 [shape = 'u8[16384]{0}', space=vmem, size = 0x4000, scoped, tag = 'input window, operand 4, single buffered']
    #allocation11 [shape = 'u8[8192]{0}', space=vmem, size = 0x2000, scoped, tag = 'input window, operand 5, single buffered']
    #allocation12 [shape = 's32[1]{0}', space=sflag, size = 0x4, scoped, tag = 'scoped memory for tpu_custom_call.1']
    #allocation13 [shape = 'u8[4096]{0}', space=vmem, size = 0x1000, scoped, tag = 'output window, operand 0, single buffered']
    %11 = vsyncpa [#allocation3], 0
    %12 = vsyncpa [#allocation6], 0
    %13 = vsyncpa [#allocation9], 0
    %14 = vsyncpa [#allocation12], 0
    %15 = vsyncpa [#allocation4], 0
    // Predicated region
    $region2: #{tpu_custom_call.1} parent=1 // pred_check
      _
    $region3: #{tpu_custom_call.1} parent=1 // pred_check_branch
      %17 = sbr.rel (0) target = $region5
    $region4: #{tpu_custom_call.1} parent=1 // pred_region
      %s19 = ssub.s32 128, 128
      %20 = vsyncadd [#allocation3], %s19
      %s22 = sshll.u32 [#allocation2], 4
      %s23 = int_to_ptr.vmem [resolvable:$true] %s22
      %25 = dma.hbm_to_vmem [thread:$0]  %s0, 128, %s23, [#allocation3]
    $region5: #{tpu_custom_call.1} parent=1 // pred_fallthru
      _
    // Predicated region
    $region6: #{tpu_custom_call.1} parent=1 // pred_check
      _
    $region7: #{tpu_custom_call.1} parent=1 // pred_check_branch
      %27 = sbr.rel (0) target = $region9
    $region8: #{tpu_custom_call.1} parent=1 // pred_region
      %s29 = ssub.s32 128, 128
      %30 = vsyncadd [#allocation6], %s29
      %s32 = sshll.u32 [#allocation5], 4
      %s33 = int_to_ptr.vmem [resolvable:$true] %s32
      %35 = dma.hbm_to_vmem [thread:$0]  %s1, 128, %s33, [#allocation6]
    $region9: #{tpu_custom_call.1} parent=1 // pred_fallthru
      _
    // Predicated region
    $region10: #{tpu_custom_call.1} parent=1 // pred_check
      _
    $region11: #{tpu_custom_call.1} parent=1 // pred_check_branch
      %37 = sbr.rel (0) target = $region13
    $region12: #{tpu_custom_call.1} parent=1 // pred_region
      %s39 = ssub.s32 384, 384
      %40 = vsyncadd [#allocation6], %s39
      %s41 = sshll.u32 [#allocation7], 4
      %s42 = int_to_ptr.vmem [resolvable:$true] %s41
      %47 = dma.hbm_to_vmem [thread:$0]  %s2, 384, %s42, [#allocation6], 192, 192, 12
    $region13: #{tpu_custom_call.1} parent=1 // pred_fallthru
      _
    // Predicated region
    $region14: #{tpu_custom_call.1} parent=1 // pred_check
      _
    $region15: #{tpu_custom_call.1} parent=1 // pred_check_branch
      %49 = sbr.rel (0) target = $region17
    $region16: #{tpu_custom_call.1} parent=1 // pred_region
      %s51 = ssub.s32 48, 48
      %52 = vsyncadd [#allocation9], %s51
      %s54 = sshll.u32 [#allocation8], 4
      %s55 = int_to_ptr.vmem [resolvable:$true] %s54
      %57 = dma.hbm_to_vmem [thread:$0]  %s3, 48, %s55, [#allocation9]
    $region17: #{tpu_custom_call.1} parent=1 // pred_fallthru
      _
    // Predicated region
    $region18: #{tpu_custom_call.1} parent=1 // pred_check
      _
    $region19: #{tpu_custom_call.1} parent=1 // pred_check_branch
      %59 = sbr.rel (0) target = $region21
    $region20: #{tpu_custom_call.1} parent=1 // pred_region
      %s61 = ssub.s32 512, 512
      %62 = vsyncadd [#allocation9], %s61
      %s63 = sshll.u32 [#allocation10], 4
      %s64 = int_to_ptr.vmem [resolvable:$true] %s63
      %69 = dma.hbm_to_vmem [thread:$0]  %s4, 512, %s64, [#allocation9], 128, 128, 8
    $region21: #{tpu_custom_call.1} parent=1 // pred_fallthru
      _
    // Predicated region
    $region22: #{tpu_custom_call.1} parent=1 // pred_check
      _
    $region23: #{tpu_custom_call.1} parent=1 // pred_check_branch
      %71 = sbr.rel (0) target = $region25
    $region24: #{tpu_custom_call.1} parent=1 // pred_region
      %s73 = ssub.s32 256, 256
      %74 = vsyncadd [#allocation12], %s73
      %s75 = sshll.u32 [#allocation11], 4
      %s76 = int_to_ptr.vmem [resolvable:$true] %s75
      %81 = dma.hbm_to_vmem [thread:$0]  %s5, 256, %s76, [#allocation12], 64, 64, 4
    $region25: #{tpu_custom_call.1} parent=1 // pred_fallthru
      _
    // Predicated region
    $region26: #{tpu_custom_call.1} parent=1 // pred_check
      _
    $region27: #{tpu_custom_call.1} parent=1 // pred_check_branch
      %83 = sbr.rel (0) target = $region29
    $region28: #{tpu_custom_call.1} parent=1 // pred_region
      %84 = dma.done [#allocation3], 128
    $region29: #{tpu_custom_call.1} parent=1 // pred_fallthru
      _
    // Predicated region
    $region30: #{tpu_custom_call.1} parent=1 // pred_check
      _
    $region31: #{tpu_custom_call.1} parent=1 // pred_check_branch
      %86 = sbr.rel (0) target = $region33
    $region32: #{tpu_custom_call.1} parent=1 // pred_region
      %87 = dma.done [#allocation6], 128
    $region33: #{tpu_custom_call.1} parent=1 // pred_fallthru
      _
    // Predicated region
    $region34: #{tpu_custom_call.1} parent=1 // pred_check
      _
    $region35: #{tpu_custom_call.1} parent=1 // pred_check_branch
      %89 = sbr.rel (0) target = $region37
    $region36: #{tpu_custom_call.1} parent=1 // pred_region
      %90 = dma.done [#allocation6], 384
    $region37: #{tpu_custom_call.1} parent=1 // pred_fallthru
      _
    // Predicated region
    $region38: #{tpu_custom_call.1} parent=1 // pred_check
      _
    $region39: #{tpu_custom_call.1} parent=1 // pred_check_branch
      %92 = sbr.rel (0) target = $region41
    $region40: #{tpu_custom_call.1} parent=1 // pred_region
      %93 = dma.done [#allocation9], 48
    $region41: #{tpu_custom_call.1} parent=1 // pred_fallthru
      _
    // Predicated region
    $region42: #{tpu_custom_call.1} parent=1 // pred_check
      _
    $region43: #{tpu_custom_call.1} parent=1 // pred_check_branch
      %95 = sbr.rel (0) target = $region45
    $region44: #{tpu_custom_call.1} parent=1 // pred_region
      %96 = dma.done [#allocation9], 512
    $region45: #{tpu_custom_call.1} parent=1 // pred_fallthru
      _
    // Predicated region
    $region46: #{tpu_custom_call.1} parent=1 // pred_check
      _
    $region47: #{tpu_custom_call.1} parent=1 // pred_check_branch
      %98 = sbr.rel (0) target = $region49
    $region48: #{tpu_custom_call.1} parent=1 // pred_region
      %99 = dma.done [#allocation12], 256
    $region49: #{tpu_custom_call.1} parent=1 // pred_fallthru
      _
    %v101 = vld [vmem:[#allocation5] sm:$0xff]
    %v102 = vld [vmem:[#allocation2] sm:$0xff]
    %v103 = vpack.c.bf16 %v102, %v102
    %v104 = vpack.c.bf16 %v101, %v101
    %v105 = vld [vmem:[#allocation7] sm:$0xff]
    %v106 = vld [vmem:[#allocation7 + $0x8] sm:$0xf]
    %v107 = vld [vmem:[#allocation7 + $0xc] sm:$0xff]
    %v108 = vld [vmem:[#allocation7 + $0x14] sm:$0xf]
    %v109 = vld [vmem:[#allocation8] sm:$0x7]
    %v111 = vlaneseq
    %v112 = vshrl.u32 %v111, 7
    %v113 = vsub.s32 0, %v112
    %v114 = vrot.slane %v109, %v113
    %v115 = vlaneseq
    %v116 = vshrl.u32 %v115, 7
    %v117 = vsub.s32 1, %v116
    %v118 = vrot.slane %v109, %v117
    %v119 = vlaneseq
    %v120 = vshrl.u32 %v119, 7
    %v121 = vsub.s32 2, %v120
    %v122 = vrot.slane %v109, %v121
    %v130 = vunpack.c.l.b16 %v105
    %v131 = vunpack.c.h.b16 %v105
    %v132 = vunpack.c.l.b16 %v106
    %v133 = vunpack.c.l.b16 %v107
    %v134 = vunpack.c.h.b16 %v107
    %v135 = vunpack.c.l.b16 %v108
    %v136 = vpack.c.b16 %v133, %v130
    %v137 = vpack.c.b16 %v134, %v131
    %v138 = vpack.c.b16 %v135, %v132
    %vm142 = vcmask 130048
    %v144 = vsel %vm142, %v103, 0
    %146 = vmatprep.subr.bf16.mxu0 %v137
    %147 = vmatpush1.bf16.msra.mxu0 %v136
    %148 = vmatprep.subr.bf16.mxu0 0
    %149 = vmatpush1.bf16.msra.mxu0 0
    %150 = vmatprep.subr.bf16.mxu0 0
    %151 = vmatpush1.bf16.msra.mxu0 0
    %152 = vmatprep.subr.bf16.mxu0 0
    %153 = vmatpush1.bf16.msra.mxu0 0
    %154 = vmatprep.subr.bf16.mxu0 0
    %155 = vmatpush1.bf16.msra.mxu0 0
    %156 = vmatprep.subr.bf16.mxu0 0
    %157 = vmatpush1.bf16.msra.mxu0 0
    %158 = vmatprep.subr.bf16.mxu0 0
    %159 = vmatpush1.bf16.msra.mxu0 0
    %160 = vmatprep.subr.bf16.mxu0 0
    %161 = vmatpush1.bf16.msra.mxu0 0
    %162 = vmatprep.subr.bf16.mxu0 0
    %163 = vmatpush1.bf16.msra.mxu0 0
    %164 = vmatprep.subr.bf16.mxu0 0
    %165 = vmatpush1.bf16.msra.mxu0 0
    %166 = vmatprep.subr.bf16.mxu0 0
    %167 = vmatpush1.bf16.msra.mxu0 0
    %168 = vmatprep.subr.bf16.mxu0 0
    %169 = vmatpush1.bf16.msra.mxu0 0
    %170 = vmatprep.subr.bf16.mxu0 0
    %171 = vmatpush1.bf16.msra.mxu0 0
    %172 = vmatprep.subr.bf16.mxu0 0
    %173 = vmatpush1.bf16.msra.mxu0 0
    %174 = vmatprep.subr.bf16.mxu0 0
    %175 = vmatpush1.bf16.msra.mxu0 0
    %176 = vmatprep.subr.bf16.mxu0 0
    %177 = vmatpush1.bf16.msra.mxu0 0
    %178 = vmatprep.mubr.bf16.mxu0 0
    %179 = vmatmul.mubr.bf16.gmra.mrb[0].mxu0 %v144
    %v180 = vpop.f32.mrb[0].mxu0
    %v181 = vadd.f32 %v114, %v180
    %v182 = vpop.f32.mrb[0].mxu0
    %v183 = vadd.f32 %v118, %v182
    %v184 = vpop.f32.mrb[0].mxu0
    %v185 = vpop.f32.mrb[0].mxu0
    %186 = vdwg.mxu0
    %187 = vmatprep.subr.bf16.mxu0 0
    %188 = vmatpush1.bf16.msra.mxu0 %v138
    %189 = vmatprep.subr.bf16.mxu0 0
    %190 = vmatpush1.bf16.msra.mxu0 0
    %191 = vmatprep.subr.bf16.mxu0 0
    %192 = vmatpush1.bf16.msra.mxu0 0
    %193 = vmatprep.subr.bf16.mxu0 0
    %194 = vmatpush1.bf16.msra.mxu0 0
    %195 = vmatprep.subr.bf16.mxu0 0
    %196 = vmatpush1.bf16.msra.mxu0 0
    %197 = vmatprep.subr.bf16.mxu0 0
    %198 = vmatpush1.bf16.msra.mxu0 0
    %199 = vmatprep.subr.bf16.mxu0 0
    %200 = vmatpush1.bf16.msra.mxu0 0
    %201 = vmatprep.subr.bf16.mxu0 0
    %202 = vmatpush1.bf16.msra.mxu0 0
    %203 = vmatprep.subr.bf16.mxu0 0
    %204 = vmatpush1.bf16.msra.mxu0 0
    %205 = vmatprep.subr.bf16.mxu0 0
    %206 = vmatpush1.bf16.msra.mxu0 0
    %207 = vmatprep.subr.bf16.mxu0 0
    %208 = vmatpush1.bf16.msra.mxu0 0
    %209 = vmatprep.subr.bf16.mxu0 0
    %210 = vmatpush1.bf16.msra.mxu0 0
    %211 = vmatprep.subr.bf16.mxu0 0
    %212 = vmatpush1.bf16.msra.mxu0 0
    %213 = vmatprep.subr.bf16.mxu0 0
    %214 = vmatpush1.bf16.msra.mxu0 0
    %215 = vmatprep.subr.bf16.mxu0 0
    %216 = vmatpush1.bf16.msra.mxu0 0
    %217 = vmatprep.subr.bf16.mxu0 0
    %218 = vmatpush1.bf16.msra.mxu0 0
    %219 = vmatprep.mubr.bf16.mxu0 0
    %220 = vmatmul.mubr.bf16.gmra.mrb[0].mxu0 %v144
    %v221 = vpop.f32.mrb[0].mxu0
    %v222 = vadd.f32 %v122, %v221
    %v223 = vpop.f32.mrb[0].mxu0
    %v224 = vpop.f32.mrb[0].mxu0
    %v225 = vpop.f32.mrb[0].mxu0
    %226 = vdwg.mxu0
    %v227 = vld [vmem:[#allocation10] sm:$0xff]
    %v228 = vld [vmem:[#allocation10 + $0x8] sm:$0xff]
    %v229 = vld [vmem:[#allocation10 + $0x10] sm:$0xff]
    %v230 = vld [vmem:[#allocation10 + $0x18] sm:$0xff]
    %v235 = vunpack.c.l.b16 %v227
    %v236 = vunpack.c.h.b16 %v227
    %v237 = vunpack.c.l.b16 %v228
    %v238 = vunpack.c.h.b16 %v228
    %v239 = vunpack.c.l.b16 %v229
    %v240 = vunpack.c.h.b16 %v229
    %v241 = vunpack.c.l.b16 %v230
    %v242 = vunpack.c.h.b16 %v230
    %v243 = vpack.c.b16 %v237, %v235
    %v244 = vpack.c.b16 %v238, %v236
    %v245 = vpack.c.b16 %v241, %v239
    %v246 = vpack.c.b16 %v242, %v240
    %vm251 = vcmask 261120
    %v253 = vsel %vm251, %v104, 0
    %255 = vmatprep.subr.bf16.mxu0 %v244
    %256 = vmatpush1.bf16.msra.mxu0 %v243
    %257 = vmatprep.subr.bf16.mxu0 %v246
    %258 = vmatpush1.bf16.msra.mxu0 %v245
    %259 = vmatprep.subr.bf16.mxu0 0
    %260 = vmatpush1.bf16.msra.mxu0 0
    %261 = vmatprep.subr.bf16.mxu0 0
    %262 = vmatpush1.bf16.msra.mxu0 0
    %263 = vmatprep.subr.bf16.mxu0 0
    %264 = vmatpush1.bf16.msra.mxu0 0
    %265 = vmatprep.subr.bf16.mxu0 0
    %266 = vmatpush1.bf16.msra.mxu0 0
    %267 = vmatprep.subr.bf16.mxu0 0
    %268 = vmatpush1.bf16.msra.mxu0 0
    %269 = vmatprep.subr.bf16.mxu0 0
    %270 = vmatpush1.bf16.msra.mxu0 0
    %271 = vmatprep.subr.bf16.mxu0 0
    %272 = vmatpush1.bf16.msra.mxu0 0
    %273 = vmatprep.subr.bf16.mxu0 0
    %274 = vmatpush1.bf16.msra.mxu0 0
    %275 = vmatprep.subr.bf16.mxu0 0
    %276 = vmatpush1.bf16.msra.mxu0 0
    %277 = vmatprep.subr.bf16.mxu0 0
    %278 = vmatpush1.bf16.msra.mxu0 0
    %279 = vmatprep.subr.bf16.mxu0 0
    %280 = vmatpush1.bf16.msra.mxu0 0
    %281 = vmatprep.subr.bf16.mxu0 0
    %282 = vmatpush1.bf16.msra.mxu0 0
    %283 = vmatprep.subr.bf16.mxu0 0
    %284 = vmatpush1.bf16.msra.mxu0 0
    %285 = vmatprep.subr.bf16.mxu0 0
    %286 = vmatpush1.bf16.msra.mxu0 0
    %287 = vmatprep.mubr.bf16.mxu0 0
    %288 = vmatmul.mubr.bf16.gmra.mrb[0].mxu0 %v253
    %v289 = vpop.f32.mrb[0].mxu0
    %v290 = vadd.f32 0.0, %v289
    %v291 = vpop.f32.mrb[0].mxu0
    %v292 = vadd.f32 0.0, %v291
    %v293 = vpop.f32.mrb[0].mxu0
    %v294 = vpop.f32.mrb[0].mxu0
    %295 = vdwg.mxu0
    %v296 = vadd.f32 %v183, %v290
    %v297 = vxor.u32 %v296, 2147483648
    %v298 = vmul.f32 %v297, 1.442695
    %v299 = vpow.pop %v298
    %v300 = vadd.f32 %v299, 1.0
    %v301 = vrcp.pop %v300
    %v302 = vmul.f32 1.0, %v301
    %v303 = vadd.f32 %v222, %v292
    %v304 = vxor.u32 %v303, 2147483648
    %v305 = vmul.f32 %v304, 1.442695
    %v306 = vpow.pop %v305
    %v307 = vadd.f32 %v306, 1.0
    %v308 = vrcp.pop %v307
    %v309 = vmul.f32 1.0, %v308
    %v310 = vmul.f32 %v101, %v309
    %v311 = vpack.c.bf16 %v310, %v310
    %v312 = vld [vmem:[#allocation11] sm:$0xf]
    %v313 = vld [vmem:[#allocation11 + $0x4] sm:$0xf]
    %v314 = vld [vmem:[#allocation11 + $0x8] sm:$0xf]
    %v315 = vld [vmem:[#allocation11 + $0xc] sm:$0xf]
    %v320 = vunpack.c.l.b16 %v312
    %v321 = vunpack.c.l.b16 %v313
    %v322 = vunpack.c.l.b16 %v314
    %v323 = vunpack.c.l.b16 %v315
    %v324 = vpack.c.b16 %v321, %v320
    %v325 = vpack.c.b16 %v323, %v322
    %v329 = vsel %vm251, %v311, 0
    %331 = vmatprep.subr.bf16.mxu0 0
    %332 = vmatpush1.bf16.msra.mxu0 %v324
    %333 = vmatprep.subr.bf16.mxu0 0
    %334 = vmatpush1.bf16.msra.mxu0 %v325
    %335 = vmatprep.subr.bf16.mxu0 0
    %336 = vmatpush1.bf16.msra.mxu0 0
    %337 = vmatprep.subr.bf16.mxu0 0
    %338 = vmatpush1.bf16.msra.mxu0 0
    %339 = vmatprep.subr.bf16.mxu0 0
    %340 = vmatpush1.bf16.msra.mxu0 0
    %341 = vmatprep.subr.bf16.mxu0 0
    %342 = vmatpush1.bf16.msra.mxu0 0
    %343 = vmatprep.subr.bf16.mxu0 0
    %344 = vmatpush1.bf16.msra.mxu0 0
    %345 = vmatprep.subr.bf16.mxu0 0
    %346 = vmatpush1.bf16.msra.mxu0 0
    %347 = vmatprep.subr.bf16.mxu0 0
    %348 = vmatpush1.bf16.msra.mxu0 0
    %349 = vmatprep.subr.bf16.mxu0 0
    %350 = vmatpush1.bf16.msra.mxu0 0
    %351 = vmatprep.subr.bf16.mxu0 0
    %352 = vmatpush1.bf16.msra.mxu0 0
    %353 = vmatprep.subr.bf16.mxu0 0
    %354 = vmatpush1.bf16.msra.mxu0 0
    %355 = vmatprep.subr.bf16.mxu0 0
    %356 = vmatpush1.bf16.msra.mxu0 0
    %357 = vmatprep.subr.bf16.mxu0 0
    %358 = vmatpush1.bf16.msra.mxu0 0
    %359 = vmatprep.subr.bf16.mxu0 0
    %360 = vmatpush1.bf16.msra.mxu0 0
    %361 = vmatprep.subr.bf16.mxu0 0
    %362 = vmatpush1.bf16.msra.mxu0 0
    %363 = vmatprep.mubr.bf16.mxu0 0
    %364 = vmatmul.mubr.bf16.gmra.mrb[0].mxu0 %v329
    %v365 = vpop.f32.mrb[0].mxu0
    %v366 = vadd.f32 0.0, %v365
    %v367 = vpop.f32.mrb[0].mxu0
    %v368 = vpop.f32.mrb[0].mxu0
    %v369 = vpop.f32.mrb[0].mxu0
    %370 = vdwg.mxu0
    %v371 = vadd.f32 %v181, %v366
    %v372 = vtanh.pop %v371
    %v373 = vsub.f32 %v372, %v101
    %v374 = vmul.f32 %v302, %v373
    %v375 = vadd.f32 %v101, %v374
    %376 = vst.msk [vmem:[#allocation13] sm:$0xff] %vm251, %v375
    // Predicated region
    $region50: #{tpu_custom_call.1} parent=1 // pred_check
      _
    $region51: #{tpu_custom_call.1} parent=1 // pred_check_branch
      %378 = sbr.rel (0) target = $region53
    $region52: #{tpu_custom_call.1} parent=1 // pred_region
      %s380 = ssub.s32 128, 128
      %381 = vsyncadd [#allocation4], %s380
      %s383 = sshll.u32 [#allocation13], 4
      %s384 = int_to_ptr.vmem [resolvable:$true] %s383
      %386 = dma.vmem_to_hbm [thread:$0]  %s384, 128, %s6, [#allocation4]
    $region53: #{tpu_custom_call.1} parent=1 // pred_fallthru
      _
    // Predicated region
    $region54: #{tpu_custom_call.1} parent=1 // pred_check
      _
    $region55: #{tpu_custom_call.1} parent=1 // pred_check_branch
      %388 = sbr.rel (0) target = $region57
    $region56: #{tpu_custom_call.1} parent=1 // pred_region
      %389 = dma.done [#allocation4], 128
    $region57: #{tpu_custom_call.1} parent=1 // pred_fallthru
      _
    %390 = vsyncpa [#allocation3], 1
    %391 = vsyncpa [#allocation6], 1
    %392 = vsyncpa [#allocation9], 1
    %393 = vsyncpa [#allocation12], 1
    %394 = vsyncpa [#allocation4], 1

</llo_original>
